<compile_context>
chip_gen: v6e
topology: v6e:2x2x1
jax: 0.10.0
libtpu: 0.0.40
codegen_flags: <defaults>
</compile_context>

<pallas_src>
import jax
import jax.numpy as jnp
import numpy as np
from jax.experimental import pallas as pl
from jax.experimental.pallas import tpu as pltpu


def _round_up(v, m):
    return ((v + m - 1) // m) * m


def _choose_tile_f(f):
    """Feature (lane) tile: a 128-multiple that divides f, else the full width."""
    if f % 128 == 0:
        for cand in (2048, 1024, 512, 256, 128):
            if f % cand == 0:
                return cand
    return f


def _choose_tile_n(n, tile_f):
    """Rows per block: largest tile whose double-buffered x slab stays well under
    the scoped-VMEM budget on every generation (v7x has only 64 MiB physical)."""
    per_buffer_budget = 4 * 1024 * 1024            # bytes of x per pipeline buffer
    rows = per_buffer_budget // max(1, tile_f * 4)
    rows = max(8, min(1024, rows))
    rows = (rows // 8) * 8                         # keep sublane-aligned
    return max(8, min(rows, _round_up(n, 8)))


def _logreg_kernel(x_ref, w_ref, b_ref, o_ref, acc_ref):
    """One (TILE_N, TILE_F) step of sigmoid(x @ w.T + b).

    x_ref : (TILE_N, TILE_F) VMEM
    w_ref : (1, TILE_F)      VMEM  (resident weight slice)
    b_ref : (1,)             SMEM  (scalar bias)
    o_ref : (TILE_N, 1)      VMEM  (written on the last feature step)
    acc_ref: (TILE_N, 1)     VMEM f32 scratch accumulator
    """
    k = pl.program_id(1)

    @pl.when(k == 0)
    def _init():
        acc_ref[...] = jnp.zeros_like(acc_ref)

    # Row-wise dot product = broadcast multiply (VPU) + lane reduction (XLU).
    # A (TILE_N, TILE_F) x (TILE_F, 1) matmul would waste all but one MXU
    # output column and the kernel is HBM-bound anyway.
    x = x_ref[...]
    if x.dtype != jnp.float32:          # allow bf16 x; upcast once in-kernel
        x = x.astype(jnp.float32)
    w = w_ref[...]                      # already f32
    acc_ref[...] += jnp.sum(x * w, axis=-1, keepdims=True)

    @pl.when(k == pl.num_programs(1) - 1)
    def _finalize():
        logits = acc_ref[...] + b_ref[0]
        # sigmoid(z) = 1 / (1 + exp(-z)); exp and approx reciprocal both issue
        # on the EUP slot, freeing VALU slots.
        probas = pl.reciprocal(1.0 + jnp.exp(-logits), approx=True)
        o_ref[...] = probas.astype(o_ref.dtype)


def logistic_regression_forward(x, weight, bias):
    """probas = sigmoid(x @ weight.T + bias), computed in a tiled Pallas kernel.

    x      : (batch, num_features) float32 (or bfloat16)
    weight : (1, num_features)     float32
    bias   : (1,)                  float32
    returns: (batch, 1)            float32
    """
    n, f = x.shape
    assert weight.shape == (1, f), weight.shape
    weight = weight.astype(jnp.float32)
    bias = jnp.asarray(bias, jnp.float32).reshape(1)

    tile_f = _choose_tile_f(f)
    tile_n = _choose_tile_n(n, tile_f)
    grid = (pl.cdiv(n, tile_n), f // tile_f)

    return pl.pallas_call(
        _logreg_kernel,
        out_shape=jax.ShapeDtypeStruct((n, 1), jnp.float32),
        grid=grid,
        in_specs=[
            # x: batch-tiled, feature-tiled, auto double-buffered pipeline.
            pl.BlockSpec((tile_n, tile_f), lambda i, k: (i, k)),
            # weight: constant across the batch axis -> stays resident per k.
            pl.BlockSpec((1, tile_f), lambda i, k: (0, k)),
            # bias: single scalar in SMEM (no VMEM block / vreg broadcast).
            pl.BlockSpec(memory_space=pltpu.MemorySpace.SMEM),
        ],
        out_specs=pl.BlockSpec((tile_n, 1), lambda i, k: (i, 0)),
        scratch_shapes=[pltpu.VMEM((tile_n, 1), jnp.float32)],
        compiler_params=pltpu.CompilerParams(
            dimension_semantics=("parallel", "arbitrary"),
            vmem_limit_bytes=32 * 1024 * 1024,
        ),
    )(x, weight, bias)


class LogisticRegressionPallas:
    """Mirrors the PyTorch module: Linear(num_features, 1) with zeroed params."""

    def __init__(self, num_features):
        self.num_features = num_features
        self.weight = jnp.zeros((1, num_features), dtype=jnp.float32)
        self.bias = jnp.zeros((1,), dtype=jnp.float32)

    def __call__(self, x):
        return logistic_regression_forward(x, self.weight, self.bias)


if __name__ == "__main__":
    key = jax.random.PRNGKey(0)
    k0, k1, k2, k3 = jax.random.split(key, 4)

    # Test 1: zero-initialized module (exactly like the PyTorch __init__);
    # every probability must be 0.5.
    batch, num_features = 64, 32
    x = jax.random.normal(k0, (batch, num_features), dtype=jnp.float32)
    model = LogisticRegressionPallas(num_features)
    probas = jax.block_until_ready(model(x))
    assert probas.shape == (batch, 1)
    np.testing.assert_allclose(np.asarray(probas), 0.5, rtol=0.0, atol=1e-3)

    # Test 2: random parameters with a feature dim that exercises the
    # feature-reduction grid axis (384 features -> 3 k-steps of 128 lanes).
    batch2, feat2 = 64, 384
    x2 = jax.random.normal(k1, (batch2, feat2), dtype=jnp.float32)
    w2 = jax.random.normal(k2, (1, feat2), dtype=jnp.float32) * 0.1
    b2 = jax.random.normal(k3, (1,), dtype=jnp.float32)
    out2 = jax.block_until_ready(logistic_regression_forward(x2, w2, b2))
    ref2 = jax.nn.sigmoid(x2 @ w2.T + b2)
    np.testing.assert_allclose(np.asarray(out2), np.asarray(ref2),
                               rtol=2e-3, atol=2e-3)

    print("KERNEL_OK")
</pallas_src>

<mosaic_0001>
module attributes {stable_mosaic.version = 11 : i64} {
  func.func @_logreg_kernel(%arg0: i32, %arg1: i32, %arg2: memref<64x32xf32, #tpu.memory_space<vmem>>, %arg3: memref<1x32xf32, #tpu.memory_space<vmem>>, %arg4: memref<1xf32, #tpu.memory_space<smem>>, %arg5: memref<64x1xf32, #tpu.memory_space<vmem>>, %arg6: memref<64x1xf32, #tpu.memory_space<vmem>>) attributes {dimension_semantics = [#tpu.dimension_semantics<parallel>, #tpu.dimension_semantics<arbitrary>], iteration_bounds = array<i64: 1, 1>, scalar_prefetch = 0 : i64, scratch_operands = 1 : i64, tpu.core_type = #tpu.core_type<tc>, window_params = [{transform_indices = @transform_0, window_bounds = array<i64: 64, 32>}, {transform_indices = @transform_1, window_bounds = array<i64: 1, 32>}, {transform_indices = @transform_2, window_bounds = array<i64: 1>}, {transform_indices = @transform_3, window_bounds = array<i64: 64, 1>}]} {
    %c0_i32 = arith.constant 0 : i32
    %0 = arith.cmpi eq, %arg1, %c0_i32 : i32
    %1 = arith.extui %0 : i1 to i32
    %c0_i32_0 = arith.constant 0 : i32
    %2 = arith.cmpi ne, %1, %c0_i32_0 : i32
    scf.if %2 {
      %cst_10 = arith.constant 0.000000e+00 : f32
      %15 = vector.broadcast %cst_10 : f32 to vector<64x1xf32>
      %c0_11 = arith.constant 0 : index
      %c0_12 = arith.constant 0 : index
      %16 = vector.load %arg6[%c0_11, %c0_12] : memref<64x1xf32, #tpu.memory_space<vmem>>, vector<64x1xf32>
      tpu.vector_store %arg6[%c0_11, %c0_12], %15 {strides = array<i32>} : memref<64x1xf32, #tpu.memory_space<vmem>>, vector<64x1xf32>,
    } else {
    }
    %c0 = arith.constant 0 : index
    %c0_1 = arith.constant 0 : index
    %3 = vector.load %arg2[%c0, %c0_1] : memref<64x32xf32, #tpu.memory_space<vmem>>, vector<64x32xf32>
    %c0_2 = arith.constant 0 : index
    %c0_3 = arith.constant 0 : index
    %4 = vector.load %arg3[%c0_2, %c0_3] : memref<1x32xf32, #tpu.memory_space<vmem>>, vector<1x32xf32>
    %c0_4 = arith.constant 0 : index
    %c0_5 = arith.constant 0 : index
    %5 = vector.load %arg6[%c0_4, %c0_5] : memref<64x1xf32, #tpu.memory_space<vmem>>, vector<64x1xf32>
    %6 = vector.broadcast %4 : vector<1x32xf32> to vector<64x32xf32>
    %7 = arith.mulf %3, %6 : vector<64x32xf32>
    %cst = arith.constant dense<0.000000e+00> : vector<64xf32>
    %8 = vector.multi_reduction <add>, %7, %cst [1] : vector<64x32xf32> to vector<64xf32>
    %9 = vector.shape_cast %8 : vector<64xf32> to vector<64x1xf32>
    %10 = arith.addf %5, %9 : vector<64x1xf32>
    %c0_6 = arith.constant 0 : index
    %c0_7 = arith.constant 0 : index
    %11 = vector.load %arg6[%c0_6, %c0_7] : memref<64x1xf32, #tpu.memory_space<vmem>>, vector<64x1xf32>
    tpu.vector_store %arg6[%c0_6, %c0_7], %10 {strides = array<i32>} : memref<64x1xf32, #tpu.memory_space<vmem>>, vector<64x1xf32>,
    %c0_i32_8 = arith.constant 0 : i32
    %12 = arith.cmpi eq, %arg1, %c0_i32_8 : i32
    %13 = arith.extui %12 : i1 to i32
    %c0_i32_9 = arith.constant 0 : i32
    %14 = arith.cmpi ne, %13, %c0_i32_9 : i32
    scf.if %14 {
      %c0_10 = arith.constant 0 : index
      %c0_11 = arith.constant 0 : index
      %15 = vector.load %arg6[%c0_10, %c0_11] : memref<64x1xf32, #tpu.memory_space<vmem>>, vector<64x1xf32>
      %c0_12 = arith.constant 0 : index
      %16 = memref.load %arg4[%c0_12] : memref<1xf32, #tpu.memory_space<smem>>
      %17 = vector.broadcast %16 : f32 to vector<64x1xf32>
      %18 = arith.addf %15, %17 : vector<64x1xf32>
      %cst_13 = arith.constant 0.000000e+00 : f32
      %19 = vector.broadcast %cst_13 : f32 to vector<64x1xf32>
      %20 = arith.subf %19, %18 : vector<64x1xf32>
      %21 = math.exp %20 : vector<64x1xf32>
      %cst_14 = arith.constant 1.000000e+00 : f32
      %22 = vector.broadcast %cst_14 : f32 to vector<64x1xf32>
      %23 = arith.addf %22, %21 : vector<64x1xf32>
      %24 = tpu.reciprocal %23 {approx = true} : vector<64x1xf32> -> vector<64x1xf32>
      %c0_15 = arith.constant 0 : index
      %c0_16 = arith.constant 0 : index
      %25 = vector.load %arg5[%c0_15, %c0_16] : memref<64x1xf32, #tpu.memory_space<vmem>>, vector<64x1xf32>
      tpu.vector_store %arg5[%c0_15, %c0_16], %24 {strides = array<i32>} : memref<64x1xf32, #tpu.memory_space<vmem>>, vector<64x1xf32>,
    } else {
    }
    return
  }
  func.func @transform_0(%arg0: i32, %arg1: i32) -> (i32, i32) {
    %c0_i32 = arith.constant 0 : i32
    return %arg0, %arg1 : i32, i32
  }
  func.func @transform_1(%arg0: i32, %arg1: i32) -> (i32, i32) {
    %c0_i32 = arith.constant 0 : i32
    %c0_i32_0 = arith.constant 0 : i32
    return %c0_i32, %arg1 : i32, i32
  }
  func.func @transform_2(%arg0: i32, %arg1: i32) -> i32 {
    %c0_i32 = arith.constant 0 : i32
    %c0_i32_0 = arith.constant 0 : i32
    return %c0_i32 : i32
  }
  func.func @transform_3(%arg0: i32, %arg1: i32) -> (i32, i32) {
    %c0_i32 = arith.constant 0 : i32
    %c0_i32_0 = arith.constant 0 : i32
    return %arg0, %c0_i32 : i32, i32
  }
}

</mosaic_0001>

<llo_original>
// kernel: tpu_custom_call.1
$region0: #{tpu_custom_call.1}
  #allocation0 [shape = 'u32[]', space=smem, size = 0x4, offset = 0x4, fixed_abs, tag = 'smem constant byte address 0x4 - core index']
  #allocation1 [shape = 'u32[144,128]{1,0:T(1,128)}', space=vmem, size = 0x12000, scoped, tag = 'internal scratch']
  #allocation2 [shape = 'f32[64,1]{1,0:T(8,128)}', space=vmem, size = 0x8000, scoped, tag = 'scratch operand']
  #allocation3 [shape = 'f32[1]{0:T(128)S(6)}', space=smem, size = 0x200, scoped, tag = 'scoped memory for tpu_custom_call.1']
  %s0 = inlined_call_operand.vmem [shape: f32[64,32], index: 0, kind: input, shape index: {}]
  %s1 = inlined_call_operand.vmem [shape: f32[1,32], index: 1, kind: input, shape index: {}]
  %s2 = inlined_call_operand.<no memory space> [shape: f32[1], index: 2, kind: input, shape index: {}]
  %s3 = inlined_call_operand.vmem [shape: f32[64,1], index: 3, kind: output, shape index: {}]
  %s4 = sld [smem:[#allocation0]]
  $region30: #{tpu_custom_call.1} parent=0
    _
  %s6 = ssub.s32 1, %s4
  %s7 = scalar_select 0, %s6, %s4
  %8 = sst [smem:[#allocation3]] %s2
  // Predicated region
  $region2: #{tpu_custom_call.1} parent=0 // pred_check
    _
  $region3: #{tpu_custom_call.1} parent=0 // pred_check_branch
    %10 = sbr.rel (0) target = $region5
  $region4: #{tpu_custom_call.1} parent=0 // pred_region
    _
  $region5: #{tpu_custom_call.1} parent=0 // pred_fallthru
    _
  // Predicated region
  $region6: #{tpu_custom_call.1} parent=0 // pred_check
    _
  $region7: #{tpu_custom_call.1} parent=0 // pred_check_branch
    %12 = sbr.rel (0) target = $region9
  $region8: #{tpu_custom_call.1} parent=0 // pred_region
    _
  $region9: #{tpu_custom_call.1} parent=0 // pred_fallthru
    _
  // Predicated region
  $region10: #{tpu_custom_call.1} parent=0 // pred_check
    _
  $region11: #{tpu_custom_call.1} parent=0 // pred_check_branch
    %14 = sbr.rel (0) target = $region13
  $region12: #{tpu_custom_call.1} parent=0 // pred_region
    _
  $region13: #{tpu_custom_call.1} parent=0 // pred_fallthru
    _
  %p15 = scmp.eq.s32.totalorder 0, 0
  // Predicated region
  $region14: #{tpu_custom_call.1} parent=0 // pred_check
    %p16 = pneg %p15
  $region15: #{tpu_custom_call.1} parent=0 // pred_check_branch
    %18 = sbr.rel (%p16) target = $region17
  $region16: #{tpu_custom_call.1} parent=0 // pred_region
    %vm19 = vcmask 7168
    %20 = vst.msk [vmem:[#allocation2] sm:$0xff] %vm19, 0.0
    %21 = vst.msk [vmem:[#allocation2 + $0x8] sm:$0xff] %vm19, 0.0
    %22 = vst.msk [vmem:[#allocation2 + $0x10] sm:$0xff] %vm19, 0.0
    %23 = vst.msk [vmem:[#allocation2 + $0x18] sm:$0xff] %vm19, 0.0
    %24 = vst.msk [vmem:[#allocation2 + $0x20] sm:$0xff] %vm19, 0.0
    %25 = vst.msk [vmem:[#allocation2 + $0x28] sm:$0xff] %vm19, 0.0
    %26 = vst.msk [vmem:[#allocation2 + $0x30] sm:$0xff] %vm19, 0.0
    %27 = vst.msk [vmem:[#allocation2 + $0x38] sm:$0xff] %vm19, 0.0
  $region17: #{tpu_custom_call.1} parent=0 // pred_fallthru
    _
  %v28 = vld [vmem:[%s0] sm:$0xff]
  %v29 = vld [vmem:[%s0 + $0x8] sm:$0xff]
  %v30 = vld [vmem:[%s0 + $0x10] sm:$0xff]
  %v31 = vld [vmem:[%s0 + $0x18] sm:$0xff]
  %v32 = vld [vmem:[%s0 + $0x20] sm:$0xff]
  %v33 = vld [vmem:[%s0 + $0x28] sm:$0xff]
  %v34 = vld [vmem:[%s0 + $0x30] sm:$0xff]
  %v35 = vld [vmem:[%s0 + $0x38] sm:$0xff]
  %v36 = vld [vmem:[%s1] sm:$0x1]
  %v37 = vld [vmem:[#allocation2] sm:$0xff]
  %v38 = vld [vmem:[#allocation2 + $0x8] sm:$0xff]
  %v39 = vld [vmem:[#allocation2 + $0x10] sm:$0xff]
  %v40 = vld [vmem:[#allocation2 + $0x18] sm:$0xff]
  %v41 = vld [vmem:[#allocation2 + $0x20] sm:$0xff]
  %v42 = vld [vmem:[#allocation2 + $0x28] sm:$0xff]
  %v43 = vld [vmem:[#allocation2 + $0x30] sm:$0xff]
  %v44 = vld [vmem:[#allocation2 + $0x38] sm:$0xff]
  %v46 = vlaneseq
  %v47 = vshrl.u32 %v46, 7
  %v48 = vsub.s32 0, %v47
  %v49 = vrot.slane %v36, %v48
  %v51 = vmul.f32 %v28, %v49
  %v52 = vmul.f32 %v29, %v49
  %v53 = vmul.f32 %v30, %v49
  %v54 = vmul.f32 %v31, %v49
  %v55 = vmul.f32 %v32, %v49
  %v56 = vmul.f32 %v33, %v49
  %v57 = vmul.f32 %v34, %v49
  %v58 = vmul.f32 %v35, %v49
  %vm59 = vcmask 261120
  %v60 = vsel %vm59, %v51, 0.0
  %61 = vadd.xlane.f32.xlu0 %v60
  %v62 = vpop.xlane.xlu0 %61
  %v63 = vsel %vm59, %v52, 0.0
  %64 = vadd.xlane.f32.xlu0 %v63
  %v65 = vpop.xlane.xlu0 %64
  %v66 = vsel %vm59, %v53, 0.0
  %67 = vadd.xlane.f32.xlu0 %v66
  %v68 = vpop.xlane.xlu0 %67
  %v69 = vsel %vm59, %v54, 0.0
  %70 = vadd.xlane.f32.xlu0 %v69
  %v71 = vpop.xlane.xlu0 %70
  %v72 = vsel %vm59, %v55, 0.0
  %73 = vadd.xlane.f32.xlu0 %v72
  %v74 = vpop.xlane.xlu0 %73
  %v75 = vsel %vm59, %v56, 0.0
  %76 = vadd.xlane.f32.xlu0 %v75
  %v77 = vpop.xlane.xlu0 %76
  %v78 = vsel %vm59, %v57, 0.0
  %79 = vadd.xlane.f32.xlu0 %v78
  %v80 = vpop.xlane.xlu0 %79
  %v81 = vsel %vm59, %v58, 0.0
  %82 = vadd.xlane.f32.xlu0 %v81
  %v83 = vpop.xlane.xlu0 %82
  %v84 = vadd.f32 %v37, %v62
  %v85 = vadd.f32 %v38, %v65
  %v86 = vadd.f32 %v39, %v68
  %v87 = vadd.f32 %v40, %v71
  %v88 = vadd.f32 %v41, %v74
  %v89 = vadd.f32 %v42, %v77
  %v90 = vadd.f32 %v43, %v80
  %v91 = vadd.f32 %v44, %v83
  %vm92 = vcmask 7168
  %93 = vst.msk [vmem:[#allocation2] sm:$0xff] %vm92, %v84
  %94 = vst.msk [vmem:[#allocation2 + $0x8] sm:$0xff] %vm92, %v85
  %95 = vst.msk [vmem:[#allocation2 + $0x10] sm:$0xff] %vm92, %v86
  %96 = vst.msk [vmem:[#allocation2 + $0x18] sm:$0xff] %vm92, %v87
  %97 = vst.msk [vmem:[#allocation2 + $0x20] sm:$0xff] %vm92, %v88
  %98 = vst.msk [vmem:[#allocation2 + $0x28] sm:$0xff] %vm92, %v89
  %99 = vst.msk [vmem:[#allocation2 + $0x30] sm:$0xff] %vm92, %v90
  %100 = vst.msk [vmem:[#allocation2 + $0x38] sm:$0xff] %vm92, %v91
  // Predicated region
  $region18: #{tpu_custom_call.1} parent=0 // pred_check
    %p101 = pneg %p15
  $region19: #{tpu_custom_call.1} parent=0 // pred_check_branch
    %103 = sbr.rel (%p101) target = $region21
  $region20: #{tpu_custom_call.1} parent=0 // pred_region
    %v104 = vld [vmem:[#allocation2] sm:$0xff]
    %v105 = vld [vmem:[#allocation2 + $0x8] sm:$0xff]
    %v106 = vld [vmem:[#allocation2 + $0x10] sm:$0xff]
    %v107 = vld [vmem:[#allocation2 + $0x18] sm:$0xff]
    %v108 = vld [vmem:[#allocation2 + $0x20] sm:$0xff]
    %v109 = vld [vmem:[#allocation2 + $0x28] sm:$0xff]
    %v110 = vld [vmem:[#allocation2 + $0x30] sm:$0xff]
    %v111 = vld [vmem:[#allocation2 + $0x38] sm:$0xff]
    %s112 = sld [smem:[#allocation3]]
    %v113 = vstv %s112
    %v114 = vadd.f32 %v104, %v113
    %v115 = vadd.f32 %v105, %v113
    %v116 = vadd.f32 %v106, %v113
    %v117 = vadd.f32 %v107, %v113
    %v118 = vadd.f32 %v108, %v113
    %v119 = vadd.f32 %v109, %v113
    %v120 = vadd.f32 %v110, %v113
    %v121 = vadd.f32 %v111, %v113
    %v122 = vsub.f32 0.0, %v114
    %v123 = vsub.f32 0.0, %v115
    %v124 = vsub.f32 0.0, %v116
    %v125 = vsub.f32 0.0, %v117
    %v126 = vsub.f32 0.0, %v118
    %v127 = vsub.f32 0.0, %v119
    %v128 = vsub.f32 0.0, %v120
    %v129 = vsub.f32 0.0, %v121
    %v130 = vmul.f32 %v122, 1.442695
    %v131 = vpow.pop %v130
    %v132 = vmul.f32 %v123, 1.442695
    %v133 = vpow.pop %v132
    %v134 = vmul.f32 %v124, 1.442695
    %v135 = vpow.pop %v134
    %v136 = vmul.f32 %v125, 1.442695
    %v137 = vpow.pop %v136
    %v138 = vmul.f32 %v126, 1.442695
    %v139 = vpow.pop %v138
    %v140 = vmul.f32 %v127, 1.442695
    %v141 = vpow.pop %v140
    %v142 = vmul.f32 %v128, 1.442695
    %v143 = vpow.pop %v142
    %v144 = vmul.f32 %v129, 1.442695
    %v145 = vpow.pop %v144
    %v146 = vadd.f32 %v131, 1.0
    %v147 = vadd.f32 %v133, 1.0
    %v148 = vadd.f32 %v135, 1.0
    %v149 = vadd.f32 %v137, 1.0
    %v150 = vadd.f32 %v139, 1.0
    %v151 = vadd.f32 %v141, 1.0
    %v152 = vadd.f32 %v143, 1.0
    %v153 = vadd.f32 %v145, 1.0
    %v154 = vrcp.pop %v146
    %v155 = vrcp.pop %v147
    %v156 = vrcp.pop %v148
    %v157 = vrcp.pop %v149
    %v158 = vrcp.pop %v150
    %v159 = vrcp.pop %v151
    %v160 = vrcp.pop %v152
    %v161 = vrcp.pop %v153
    %162 = vst.msk [vmem:[%s3] sm:$0xff] %vm92, %v154
    %163 = vst.msk [vmem:[%s3 + $0x8] sm:$0xff] %vm92, %v155
    %164 = vst.msk [vmem:[%s3 + $0x10] sm:$0xff] %vm92, %v156
    %165 = vst.msk [vmem:[%s3 + $0x18] sm:$0xff] %vm92, %v157
    %166 = vst.msk [vmem:[%s3 + $0x20] sm:$0xff] %vm92, %v158
    %167 = vst.msk [vmem:[%s3 + $0x28] sm:$0xff] %vm92, %v159
    %168 = vst.msk [vmem:[%s3 + $0x30] sm:$0xff] %vm92, %v160
    %169 = vst.msk [vmem:[%s3 + $0x38] sm:$0xff] %vm92, %v161
  $region21: #{tpu_custom_call.1} parent=0 // pred_fallthru
    _
  // Predicated region
  $region22: #{tpu_custom_call.1} parent=0 // pred_check
    _
  $region23: #{tpu_custom_call.1} parent=0 // pred_check_branch
    %171 = sbr.rel (0) target = $region25
  $region24: #{tpu_custom_call.1} parent=0 // pred_region
    _
  $region25: #{tpu_custom_call.1} parent=0 // pred_fallthru
    _
  // Predicated region
  $region26: #{tpu_custom_call.1} parent=0 // pred_check
    _
  $region27: #{tpu_custom_call.1} parent=0 // pred_check_branch
    %173 = sbr.rel (0) target = $region29
  $region28: #{tpu_custom_call.1} parent=0 // pred_region
    _
  $region29: #{tpu_custom_call.1} parent=0 // pred_fallthru
    _

</llo_original>
